<compile_context>
chip_gen: v7x
topology: tpu7x:2x2x1
jax: 0.10.0
libtpu: 0.0.40
codegen_flags: <defaults>
</compile_context>

<pallas_src>
import jax
import jax.numpy as jnp
from jax.experimental import pallas as pl
from jax.experimental.pallas import tpu as pltpu

NUM_LAYERS = 2
NUM_DIM = 500
DIM2 = 128
OUT_DIM = 64
EPS = 1e-6            # torch.nn.functional.pairwise_distance default eps
MAX_TB = 512          # batch tile (multiple of 128 -> lane-dense output blocks)
VMEM_LIMIT_BYTES = 40 * 1024 * 1024   # explicit: > v5e 16 MiB default, < v7x 64 MiB physical


def _round_up(x, m):
    return (x + m - 1) // m * m


def simple6_kernel(s1_ref, s2_ref, ref_ref, w1_ref, b1_ref, w2_ref, b2_ref, out_ref):
    tb = s1_ref.shape[0]                                   # static block size

    # Fuse the three MLP calls: one (3*TB, L*D) activation block, one matmul
    # pair (single W1'/W2 staging per tile).
    x_all = jnp.concatenate([s1_ref[...], s2_ref[...], ref_ref[...]], axis=0)

    # fc1 (layer-mix already folded into w1' in the wrapper) + ReLU.
    h = jnp.dot(x_all, w1_ref[...], preferred_element_type=jnp.float32)
    h = jnp.maximum(h + b1_ref[...], 0.0)
    # TODO(synk): Dropout(0.5) has no inference-time effect; treated as identity.

    # fc2
    y = jnp.dot(h, w2_ref[...], preferred_element_type=jnp.float32) + b2_ref[...]

    y1 = y[:tb]
    y2 = y[tb:2 * tb]
    yr = y[2 * tb:]

    # pairwise_distance(a, b, p=1) = sum(|a - b + eps|) over the feature dim.
    # d2 - d1 fused into a single reduction; done as an MXU ones-contraction so
    # the result lands directly as a lane-dense (1, TB) row (unmasked stores).
    diff = jnp.abs(y2 - yr + EPS) - jnp.abs(y1 - yr + EPS)  # (TB, 64)
    ones_row = jnp.ones((1, OUT_DIM), jnp.float32)
    out_ref[...] = pl.dot(ones_row, diff, trans_b=True)     # (1, TB)


def simple6_forward(params, s1, s2, ref):
    B = s1.shape[0]
    K = NUM_LAYERS * NUM_DIM

    # ---- parameter-only prep, hoisted out of the kernel ----
    lw = jax.nn.softmax(params["lw"])                       # softmax over layers
    # combine(x) @ W1  ==  x.reshape(B, L*D) @ concat([lw_l * W1], axis=0)
    w1p = jnp.concatenate([lw[l] * params["w1"] for l in range(NUM_LAYERS)], axis=0)

    # ---- inputs: (B, L, D) -> (B, L*D) (free reshape), pad batch to tile ----
    if B <= MAX_TB:
        tb = _round_up(max(B, 1), 8)      # single tile, sublane aligned
    else:
        tb = MAX_TB
    b_pad = _round_up(B, tb)

    def prep(x):
        x = x.reshape(B, K)
        if b_pad != B:
            x = jnp.pad(x, ((0, b_pad - B), (0, 0)))
        return x

    s1f, s2f, reff = prep(s1), prep(s2), prep(ref)
    grid = (b_pad // tb,)

    x_spec = pl.BlockSpec((tb, K), lambda i: (i, 0))
    out = pl.pallas_call(
        simple6_kernel,
        out_shape=jax.ShapeDtypeStruct((1, b_pad), jnp.float32),
        grid=grid,
        in_specs=[
            x_spec, x_spec, x_spec,
            pl.BlockSpec((K, DIM2), lambda i: (0, 0)),       # w1' (VMEM-resident)
            pl.BlockSpec((1, DIM2), lambda i: (0, 0)),       # b1
            pl.BlockSpec((DIM2, OUT_DIM), lambda i: (0, 0)), # w2
            pl.BlockSpec((1, OUT_DIM), lambda i: (0, 0)),    # b2
        ],
        out_specs=pl.BlockSpec((1, tb), lambda i: (0, i)),   # lane-dense output row
        compiler_params=pltpu.CompilerParams(
            dimension_semantics=("parallel",),
            vmem_limit_bytes=VMEM_LIMIT_BYTES),
    )(s1f, s2f, reff, w1p, params["b1"], params["w2"], params["b2"])

    return out[0, :B]                                        # (B,), like the torch module


def init_params(key):
    k1, k2, k3, k4 = jax.random.split(key, 4)
    bound1 = 1.0 / jnp.sqrt(NUM_DIM)
    bound2 = 1.0 / jnp.sqrt(DIM2)
    return {
        # torch.ones(num_layers)
        "lw": jnp.ones((NUM_LAYERS,), jnp.float32),
        # Linear(500, 128): weight stored (in, out), bias (1, out).
        "w1": jax.random.uniform(k1, (NUM_DIM, DIM2), jnp.float32, -bound1, bound1),
        "b1": jax.random.uniform(k2, (1, DIM2), jnp.float32, -bound1, bound1),
        # Linear(128, 64)
        "w2": jax.random.uniform(k3, (DIM2, OUT_DIM), jnp.float32, -bound2, bound2),
        "b2": jax.random.uniform(k4, (1, OUT_DIM), jnp.float32, -bound2, bound2),
        # weight_dimension (randn(500)) is unused in forward — omitted.
    }


def reference_forward(params, s1, s2, ref):
    # Faithful (torch-ordered) reference: combine -> fc1 -> ReLU -> fc2 -> L1 distances.
    lw = jax.nn.softmax(params["lw"])                        # (L,)
    def comb(x):
        return jnp.einsum("l,bld->bd", lw, x)
    def mlp(x):
        h = jnp.maximum(x @ params["w1"] + params["b1"], 0.0)
        return h @ params["w2"] + params["b2"]
    y1, y2, yr = mlp(comb(s1)), mlp(comb(s2)), mlp(comb(ref))
    d1 = jnp.sum(jnp.abs(y1 - yr + EPS), axis=-1)
    d2 = jnp.sum(jnp.abs(y2 - yr + EPS), axis=-1)
    return d2 - d1


if __name__ == "__main__":
    key = jax.random.PRNGKey(0)
    kp, ka, kb, kc = jax.random.split(key, 4)
    params = init_params(kp)

    B = 8
    s1 = jax.random.normal(ka, (B, NUM_LAYERS, NUM_DIM), jnp.float32)
    s2 = jax.random.normal(kb, (B, NUM_LAYERS, NUM_DIM), jnp.float32)
    ref = jax.random.normal(kc, (B, NUM_LAYERS, NUM_DIM), jnp.float32)

    out = jax.block_until_ready(jax.jit(simple6_forward)(params, s1, s2, ref))
    expected = reference_forward(params, s1, s2, ref)

    assert out.shape == (B,)
    # Slightly relaxed tolerance: folding softmax into W1' reassociates the
    # 1000-term fc1 sums vs. the torch-ordered reference.
    assert jnp.allclose(out, expected, atol=1e-3, rtol=1e-3), (out, expected)
    print("KERNEL_OK")
</pallas_src>

<mosaic_0001>
module attributes {stable_mosaic.version = 11 : i64} {
  func.func @simple6_kernel(%arg0: i32, %arg1: memref<8x1000xf32, #tpu.memory_space<vmem>>, %arg2: memref<8x1000xf32, #tpu.memory_space<vmem>>, %arg3: memref<8x1000xf32, #tpu.memory_space<vmem>>, %arg4: memref<1000x128xf32, #tpu.memory_space<vmem>>, %arg5: memref<1x128xf32, #tpu.memory_space<vmem>>, %arg6: memref<128x64xf32, #tpu.memory_space<vmem>>, %arg7: memref<1x64xf32, #tpu.memory_space<vmem>>, %arg8: memref<1x8xf32, #tpu.memory_space<vmem>>) attributes {dimension_semantics = [#tpu.dimension_semantics<parallel>], iteration_bounds = array<i64: 1>, scalar_prefetch = 0 : i64, scratch_operands = 0 : i64, tpu.core_type = #tpu.core_type<tc>, window_params = [{transform_indices = @transform_0, window_bounds = array<i64: 8, 1000>}, {transform_indices = @transform_1, window_bounds = array<i64: 8, 1000>}, {transform_indices = @transform_2, window_bounds = array<i64: 8, 1000>}, {pipeline_mode = #tpu.pipeline_mode<synchronous>, transform_indices = @transform_3, window_bounds = array<i64: 1000, 128>}, {pipeline_mode = #tpu.pipeline_mode<synchronous>, transform_indices = @transform_4, window_bounds = array<i64: 1, 128>}, {pipeline_mode = #tpu.pipeline_mode<synchronous>, transform_indices = @transform_5, window_bounds = array<i64: 128, 64>}, {pipeline_mode = #tpu.pipeline_mode<synchronous>, transform_indices = @transform_6, window_bounds = array<i64: 1, 64>}, {transform_indices = @transform_7, window_bounds = array<i64: 1, 8>}]} {
    %c0 = arith.constant 0 : index
    %c0_0 = arith.constant 0 : index
    %0 = vector.load %arg1[%c0, %c0_0] : memref<8x1000xf32, #tpu.memory_space<vmem>>, vector<8x1000xf32>
    %c0_1 = arith.constant 0 : index
    %c0_2 = arith.constant 0 : index
    %1 = vector.load %arg2[%c0_1, %c0_2] : memref<8x1000xf32, #tpu.memory_space<vmem>>, vector<8x1000xf32>
    %c0_3 = arith.constant 0 : index
    %c0_4 = arith.constant 0 : index
    %2 = vector.load %arg3[%c0_3, %c0_4] : memref<8x1000xf32, #tpu.memory_space<vmem>>, vector<8x1000xf32>
    %3 = tpu.concatenate %0, %1, %2 in 0 : vector<8x1000xf32>, vector<8x1000xf32>, vector<8x1000xf32> -> vector<24x1000xf32>
    %c0_5 = arith.constant 0 : index
    %c0_6 = arith.constant 0 : index
    %4 = vector.load %arg4[%c0_5, %c0_6] : memref<1000x128xf32, #tpu.memory_space<vmem>>, vector<1000x128xf32>
    %cst = arith.constant dense<0.000000e+00> : vector<24x128xf32>
    %5 = tpu.matmul %3, %4, %cst {dimension_numbers = #tpu.dot_dimension_numbers<[1], [0], [0], [1], [0, 0, 1, 1], [], []>} : vector<24x1000xf32>, vector<1000x128xf32>, vector<24x128xf32> -> vector<24x128xf32>
    %c0_7 = arith.constant 0 : index
    %c0_8 = arith.constant 0 : index
    %6 = vector.load %arg5[%c0_7, %c0_8] : memref<1x128xf32, #tpu.memory_space<vmem>>, vector<1x128xf32>
    %7 = vector.broadcast %6 : vector<1x128xf32> to vector<24x128xf32>
    %8 = arith.addf %5, %7 : vector<24x128xf32>
    %cst_9 = arith.constant 0.000000e+00 : f32
    %9 = vector.broadcast %cst_9 : f32 to vector<24x128xf32>
    %10 = arith.maximumf %8, %9 : vector<24x128xf32>
    %c0_10 = arith.constant 0 : index
    %c0_11 = arith.constant 0 : index
    %11 = vector.load %arg6[%c0_10, %c0_11] : memref<128x64xf32, #tpu.memory_space<vmem>>, vector<128x64xf32>
    %cst_12 = arith.constant dense<0.000000e+00> : vector<24x64xf32>
    %12 = tpu.matmul %10, %11, %cst_12 {dimension_numbers = #tpu.dot_dimension_numbers<[1], [0], [0], [1], [0, 0, 1, 1], [], []>} : vector<24x128xf32>, vector<128x64xf32>, vector<24x64xf32> -> vector<24x64xf32>
    %c0_13 = arith.constant 0 : index
    %c0_14 = arith.constant 0 : index
    %13 = vector.load %arg7[%c0_13, %c0_14] : memref<1x64xf32, #tpu.memory_space<vmem>>, vector<1x64xf32>
    %14 = vector.broadcast %13 : vector<1x64xf32> to vector<24x64xf32>
    %15 = arith.addf %12, %14 : vector<24x64xf32>
    %16 = vector.extract_strided_slice %15 {offsets = [0, 0], sizes = [8, 64], strides = [1, 1]} : vector<24x64xf32> to vector<8x64xf32>
    %17 = vector.extract_strided_slice %15 {offsets = [8, 0], sizes = [8, 64], strides = [1, 1]} : vector<24x64xf32> to vector<8x64xf32>
    %18 = vector.extract_strided_slice %15 {offsets = [16, 0], sizes = [8, 64], strides = [1, 1]} : vector<24x64xf32> to vector<8x64xf32>
    %19 = arith.subf %17, %18 : vector<8x64xf32>
    %cst_15 = arith.constant 9.99999997E-7 : f32
    %20 = vector.broadcast %cst_15 : f32 to vector<8x64xf32>
    %21 = arith.addf %19, %20 : vector<8x64xf32>
    %22 = math.absf %21 : vector<8x64xf32>
    %23 = arith.subf %16, %18 : vector<8x64xf32>
    %cst_16 = arith.constant 9.99999997E-7 : f32
    %24 = vector.broadcast %cst_16 : f32 to vector<8x64xf32>
    %25 = arith.addf %23, %24 : vector<8x64xf32>
    %26 = math.absf %25 : vector<8x64xf32>
    %27 = arith.subf %22, %26 : vector<8x64xf32>
    %cst_17 = arith.constant 1.000000e+00 : f32
    %28 = vector.broadcast %cst_17 : f32 to vector<1x64xf32>
    %cst_18 = arith.constant dense<0.000000e+00> : vector<1x8xf32>
    %29 = tpu.matmul %28, %27, %cst_18 {dimension_numbers = #tpu.dot_dimension_numbers<[1], [1], [0], [0], [0, 0, 1, 0], [], []>} : vector<1x64xf32>, vector<8x64xf32>, vector<1x8xf32> -> vector<1x8xf32>
    %c0_19 = arith.constant 0 : index
    %c0_20 = arith.constant 0 : index
    %30 = vector.load %arg8[%c0_19, %c0_20] : memref<1x8xf32, #tpu.memory_space<vmem>>, vector<1x8xf32>
    tpu.vector_store %arg8[%c0_19, %c0_20], %29 {strides = array<i32>} : memref<1x8xf32, #tpu.memory_space<vmem>>, vector<1x8xf32>,
    return
  }
  func.func @transform_0(%arg0: i32) -> (i32, i32) {
    %c0_i32 = arith.constant 0 : i32
    %c0_i32_0 = arith.constant 0 : i32
    return %arg0, %c0_i32 : i32, i32
  }
  func.func @transform_1(%arg0: i32) -> (i32, i32) {
    %c0_i32 = arith.constant 0 : i32
    %c0_i32_0 = arith.constant 0 : i32
    return %arg0, %c0_i32 : i32, i32
  }
  func.func @transform_2(%arg0: i32) -> (i32, i32) {
    %c0_i32 = arith.constant 0 : i32
    %c0_i32_0 = arith.constant 0 : i32
    return %arg0, %c0_i32 : i32, i32
  }
  func.func @transform_3(%arg0: i32) -> (i32, i32) {
    %c0_i32 = arith.constant 0 : i32
    %c0_i32_0 = arith.constant 0 : i32
    %c0_i32_1 = arith.constant 0 : i32
    return %c0_i32, %c0_i32_0 : i32, i32
  }
  func.func @transform_4(%arg0: i32) -> (i32, i32) {
    %c0_i32 = arith.constant 0 : i32
    %c0_i32_0 = arith.constant 0 : i32
    %c0_i32_1 = arith.constant 0 : i32
    return %c0_i32, %c0_i32_0 : i32, i32
  }
  func.func @transform_5(%arg0: i32) -> (i32, i32) {
    %c0_i32 = arith.constant 0 : i32
    %c0_i32_0 = arith.constant 0 : i32
    %c0_i32_1 = arith.constant 0 : i32
    return %c0_i32, %c0_i32_0 : i32, i32
  }
  func.func @transform_6(%arg0: i32) -> (i32, i32) {
    %c0_i32 = arith.constant 0 : i32
    %c0_i32_0 = arith.constant 0 : i32
    %c0_i32_1 = arith.constant 0 : i32
    return %c0_i32, %c0_i32_0 : i32, i32
  }
  func.func @transform_7(%arg0: i32) -> (i32, i32) {
    %c0_i32 = arith.constant 0 : i32
    %c0_i32_0 = arith.constant 0 : i32
    return %c0_i32, %arg0 : i32, i32
  }
}

</mosaic_0001>

<llo_original>
// kernel: simple6_forward.1
$region0: #{simple6_forward.1}
  #allocation0 [shape = 'u32[]', space=smem, size = 0x4, offset = 0x4, fixed_abs, tag = 'smem constant byte address 0x4 - core index']
  #allocation1 [shape = 'u32[144,128]{1,0:T(1,128)}', space=vmem, size = 0x12000, scoped, tag = 'internal scratch']
  %s0 = inlined_call_operand.vmem [shape: f32[8,1000], index: 0, kind: input, shape index: {}]
  %s1 = inlined_call_operand.vmem [shape: f32[8,1000], index: 1, kind: input, shape index: {}]
  %s2 = inlined_call_operand.vmem [shape: f32[8,1000], index: 2, kind: input, shape index: {}]
  %s3 = inlined_call_operand.vmem [shape: f32[1000,128], index: 3, kind: input, shape index: {}]
  %s4 = inlined_call_operand.vmem [shape: f32[1,128], index: 4, kind: input, shape index: {}]
  %s5 = inlined_call_operand.vmem [shape: f32[128,64], index: 5, kind: input, shape index: {}]
  %s6 = inlined_call_operand.vmem [shape: f32[1,64], index: 6, kind: input, shape index: {}]
  %s7 = inlined_call_operand.hbm [shape: f32[1,8], index: 7, kind: output, shape index: {}]
  %s8 = sld [smem:[#allocation0]]
  $region38: #{simple6_forward.1} parent=0
    _
  %s10 = ssub.s32 1, %s8
  %s11 = scalar_select 0, %s10, %s8
  $region1: #{simple6_forward.1} parent=0
    #allocation2 [shape = 'u8[512]{0}', space=vmem, size = 0x400, scoped, tag = 'output window, operand 0, single buffered']
    #allocation3 [shape = 's32[1]{0}', space=sflag, size = 0x4, scoped, tag = 'scoped memory for simple6_forward.1']
    %12 = vsyncpa [#allocation3], 0
    // Predicated region
    $region2: #{simple6_forward.1} parent=1 // pred_check
      _
    $region3: #{simple6_forward.1} parent=1 // pred_check_branch
      %14 = sbr.rel (0) target = $region5
    $region4: #{simple6_forward.1} parent=1 // pred_region
      _
    $region5: #{simple6_forward.1} parent=1 // pred_fallthru
      _
    // Predicated region
    $region6: #{simple6_forward.1} parent=1 // pred_check
      _
    $region7: #{simple6_forward.1} parent=1 // pred_check_branch
      %16 = sbr.rel (0) target = $region9
    $region8: #{simple6_forward.1} parent=1 // pred_region
      _
    $region9: #{simple6_forward.1} parent=1 // pred_fallthru
      _
    // Predicated region
    $region10: #{simple6_forward.1} parent=1 // pred_check
      _
    $region11: #{simple6_forward.1} parent=1 // pred_check_branch
      %18 = sbr.rel (0) target = $region13
    $region12: #{simple6_forward.1} parent=1 // pred_region
      _
    $region13: #{simple6_forward.1} parent=1 // pred_fallthru
      _
    // Predicated region
    $region14: #{simple6_forward.1} parent=1 // pred_check
      _
    $region15: #{simple6_forward.1} parent=1 // pred_check_branch
      %20 = sbr.rel (0) target = $region17
    $region16: #{simple6_forward.1} parent=1 // pred_region
      _
    $region17: #{simple6_forward.1} parent=1 // pred_fallthru
      _
    // Predicated region
    $region18: #{simple6_forward.1} parent=1 // pred_check
      _
    $region19: #{simple6_forward.1} parent=1 // pred_check_branch
      %22 = sbr.rel (0) target = $region21
    $region20: #{simple6_forward.1} parent=1 // pred_region
      _
    $region21: #{simple6_forward.1} parent=1 // pred_fallthru
      _
    // Predicated region
    $region22: #{simple6_forward.1} parent=1 // pred_check
      _
    $region23: #{simple6_forward.1} parent=1 // pred_check_branch
      %24 = sbr.rel (0) target = $region25
    $region24: #{simple6_forward.1} parent=1 // pred_region
      _
    $region25: #{simple6_forward.1} parent=1 // pred_fallthru
      _
    // Predicated region
    $region26: #{simple6_forward.1} parent=1 // pred_check
      _
    $region27: #{simple6_forward.1} parent=1 // pred_check_branch
      %26 = sbr.rel (0) target = $region29
    $region28: #{simple6_forward.1} parent=1 // pred_region
      _
    $region29: #{simple6_forward.1} parent=1 // pred_fallthru
      _
    %v27 = vld [vmem:[%s0] sm:$0xff]
    %v28 = vld [vmem:[%s0 + $0x8] sm:$0xff]
    %v29 = vld [vmem:[%s0 + $0x10] sm:$0xff]
    %v30 = vld [vmem:[%s0 + $0x18] sm:$0xff]
    %v31 = vld [vmem:[%s0 + $0x20] sm:$0xff]
    %v32 = vld [vmem:[%s0 + $0x28] sm:$0xff]
    %v33 = vld [vmem:[%s0 + $0x30] sm:$0xff]
    %v34 = vld [vmem:[%s0 + $0x38] sm:$0xff]
    %v35 = vld [vmem:[%s1] sm:$0xff]
    %v36 = vld [vmem:[%s1 + $0x8] sm:$0xff]
    %v37 = vld [vmem:[%s1 + $0x10] sm:$0xff]
    %v38 = vld [vmem:[%s1 + $0x18] sm:$0xff]
    %v39 = vld [vmem:[%s1 + $0x20] sm:$0xff]
    %v40 = vld [vmem:[%s1 + $0x28] sm:$0xff]
    %v41 = vld [vmem:[%s1 + $0x30] sm:$0xff]
    %v42 = vld [vmem:[%s1 + $0x38] sm:$0xff]
    %v43 = vld [vmem:[%s2] sm:$0xff]
    %v44 = vld [vmem:[%s2 + $0x8] sm:$0xff]
    %v45 = vld [vmem:[%s2 + $0x10] sm:$0xff]
    %v46 = vld [vmem:[%s2 + $0x18] sm:$0xff]
    %v47 = vld [vmem:[%s2 + $0x20] sm:$0xff]
    %v48 = vld [vmem:[%s2 + $0x28] sm:$0xff]
    %v49 = vld [vmem:[%s2 + $0x30] sm:$0xff]
    %v50 = vld [vmem:[%s2 + $0x38] sm:$0xff]
    %v51 = vld [vmem:[%s3] sm:$0xff]
    %v52 = vld [vmem:[%s3 + $0x8] sm:$0xff]
    %v53 = vld [vmem:[%s3 + $0x10] sm:$0xff]
    %v54 = vld [vmem:[%s3 + $0x18] sm:$0xff]
    %v55 = vld [vmem:[%s3 + $0x20] sm:$0xff]
    %v56 = vld [vmem:[%s3 + $0x28] sm:$0xff]
    %v57 = vld [vmem:[%s3 + $0x30] sm:$0xff]
    %v58 = vld [vmem:[%s3 + $0x38] sm:$0xff]
    %v59 = vld [vmem:[%s3 + $0x40] sm:$0xff]
    %v60 = vld [vmem:[%s3 + $0x48] sm:$0xff]
    %v61 = vld [vmem:[%s3 + $0x50] sm:$0xff]
    %v62 = vld [vmem:[%s3 + $0x58] sm:$0xff]
    %v63 = vld [vmem:[%s3 + $0x60] sm:$0xff]
    %v64 = vld [vmem:[%s3 + $0x68] sm:$0xff]
    %v65 = vld [vmem:[%s3 + $0x70] sm:$0xff]
    %v66 = vld [vmem:[%s3 + $0x78] sm:$0xff]
    %v67 = vld [vmem:[%s3 + $0x80] sm:$0xff]
    %v68 = vld [vmem:[%s3 + $0x88] sm:$0xff]
    %v69 = vld [vmem:[%s3 + $0x90] sm:$0xff]
    %v70 = vld [vmem:[%s3 + $0x98] sm:$0xff]
    %v71 = vld [vmem:[%s3 + $0xa0] sm:$0xff]
    %v72 = vld [vmem:[%s3 + $0xa8] sm:$0xff]
    %v73 = vld [vmem:[%s3 + $0xb0] sm:$0xff]
    %v74 = vld [vmem:[%s3 + $0xb8] sm:$0xff]
    %v75 = vld [vmem:[%s3 + $0xc0] sm:$0xff]
    %v76 = vld [vmem:[%s3 + $0xc8] sm:$0xff]
    %v77 = vld [vmem:[%s3 + $0xd0] sm:$0xff]
    %v78 = vld [vmem:[%s3 + $0xd8] sm:$0xff]
    %v79 = vld [vmem:[%s3 + $0xe0] sm:$0xff]
    %v80 = vld [vmem:[%s3 + $0xe8] sm:$0xff]
    %v81 = vld [vmem:[%s3 + $0xf0] sm:$0xff]
    %v82 = vld [vmem:[%s3 + $0xf8] sm:$0xff]
    %v83 = vld [vmem:[%s3 + $0x100] sm:$0xff]
    %v84 = vld [vmem:[%s3 + $0x108] sm:$0xff]
    %v85 = vld [vmem:[%s3 + $0x110] sm:$0xff]
    %v86 = vld [vmem:[%s3 + $0x118] sm:$0xff]
    %v87 = vld [vmem:[%s3 + $0x120] sm:$0xff]
    %v88 = vld [vmem:[%s3 + $0x128] sm:$0xff]
    %v89 = vld [vmem:[%s3 + $0x130] sm:$0xff]
    %v90 = vld [vmem:[%s3 + $0x138] sm:$0xff]
    %v91 = vld [vmem:[%s3 + $0x140] sm:$0xff]
    %v92 = vld [vmem:[%s3 + $0x148] sm:$0xff]
    %v93 = vld [vmem:[%s3 + $0x150] sm:$0xff]
    %v94 = vld [vmem:[%s3 + $0x158] sm:$0xff]
    %v95 = vld [vmem:[%s3 + $0x160] sm:$0xff]
    %v96 = vld [vmem:[%s3 + $0x168] sm:$0xff]
    %v97 = vld [vmem:[%s3 + $0x170] sm:$0xff]
    %v98 = vld [vmem:[%s3 + $0x178] sm:$0xff]
    %v99 = vld [vmem:[%s3 + $0x180] sm:$0xff]
    %v100 = vld [vmem:[%s3 + $0x188] sm:$0xff]
    %v101 = vld [vmem:[%s3 + $0x190] sm:$0xff]
    %v102 = vld [vmem:[%s3 + $0x198] sm:$0xff]
    %v103 = vld [vmem:[%s3 + $0x1a0] sm:$0xff]
    %v104 = vld [vmem:[%s3 + $0x1a8] sm:$0xff]
    %v105 = vld [vmem:[%s3 + $0x1b0] sm:$0xff]
    %v106 = vld [vmem:[%s3 + $0x1b8] sm:$0xff]
    %v107 = vld [vmem:[%s3 + $0x1c0] sm:$0xff]
    %v108 = vld [vmem:[%s3 + $0x1c8] sm:$0xff]
    %v109 = vld [vmem:[%s3 + $0x1d0] sm:$0xff]
    %v110 = vld [vmem:[%s3 + $0x1d8] sm:$0xff]
    %v111 = vld [vmem:[%s3 + $0x1e0] sm:$0xff]
    %v112 = vld [vmem:[%s3 + $0x1e8] sm:$0xff]
    %v113 = vld [vmem:[%s3 + $0x1f0] sm:$0xff]
    %v114 = vld [vmem:[%s3 + $0x1f8] sm:$0xff]
    %v115 = vld [vmem:[%s3 + $0x200] sm:$0xff]
    %v116 = vld [vmem:[%s3 + $0x208] sm:$0xff]
    %v117 = vld [vmem:[%s3 + $0x210] sm:$0xff]
    %v118 = vld [vmem:[%s3 + $0x218] sm:$0xff]
    %v119 = vld [vmem:[%s3 + $0x220] sm:$0xff]
    %v120 = vld [vmem:[%s3 + $0x228] sm:$0xff]
    %v121 = vld [vmem:[%s3 + $0x230] sm:$0xff]
    %v122 = vld [vmem:[%s3 + $0x238] sm:$0xff]
    %v123 = vld [vmem:[%s3 + $0x240] sm:$0xff]
    %v124 = vld [vmem:[%s3 + $0x248] sm:$0xff]
    %v125 = vld [vmem:[%s3 + $0x250] sm:$0xff]
    %v126 = vld [vmem:[%s3 + $0x258] sm:$0xff]
    %v127 = vld [vmem:[%s3 + $0x260] sm:$0xff]
    %v128 = vld [vmem:[%s3 + $0x268] sm:$0xff]
    %v129 = vld [vmem:[%s3 + $0x270] sm:$0xff]
    %v130 = vld [vmem:[%s3 + $0x278] sm:$0xff]
    %v131 = vld [vmem:[%s3 + $0x280] sm:$0xff]
    %v132 = vld [vmem:[%s3 + $0x288] sm:$0xff]
    %v133 = vld [vmem:[%s3 + $0x290] sm:$0xff]
    %v134 = vld [vmem:[%s3 + $0x298] sm:$0xff]
    %v135 = vld [vmem:[%s3 + $0x2a0] sm:$0xff]
    %v136 = vld [vmem:[%s3 + $0x2a8] sm:$0xff]
    %v137 = vld [vmem:[%s3 + $0x2b0] sm:$0xff]
    %v138 = vld [vmem:[%s3 + $0x2b8] sm:$0xff]
    %v139 = vld [vmem:[%s3 + $0x2c0] sm:$0xff]
    %v140 = vld [vmem:[%s3 + $0x2c8] sm:$0xff]
    %v141 = vld [vmem:[%s3 + $0x2d0] sm:$0xff]
    %v142 = vld [vmem:[%s3 + $0x2d8] sm:$0xff]
    %v143 = vld [vmem:[%s3 + $0x2e0] sm:$0xff]
    %v144 = vld [vmem:[%s3 + $0x2e8] sm:$0xff]
    %v145 = vld [vmem:[%s3 + $0x2f0] sm:$0xff]
    %v146 = vld [vmem:[%s3 + $0x2f8] sm:$0xff]
    %v147 = vld [vmem:[%s3 + $0x300] sm:$0xff]
    %v148 = vld [vmem:[%s3 + $0x308] sm:$0xff]
    %v149 = vld [vmem:[%s3 + $0x310] sm:$0xff]
    %v150 = vld [vmem:[%s3 + $0x318] sm:$0xff]
    %v151 = vld [vmem:[%s3 + $0x320] sm:$0xff]
    %v152 = vld [vmem:[%s3 + $0x328] sm:$0xff]
    %v153 = vld [vmem:[%s3 + $0x330] sm:$0xff]
    %v154 = vld [vmem:[%s3 + $0x338] sm:$0xff]
    %v155 = vld [vmem:[%s3 + $0x340] sm:$0xff]
    %v156 = vld [vmem:[%s3 + $0x348] sm:$0xff]
    %v157 = vld [vmem:[%s3 + $0x350] sm:$0xff]
    %v158 = vld [vmem:[%s3 + $0x358] sm:$0xff]
    %v159 = vld [vmem:[%s3 + $0x360] sm:$0xff]
    %v160 = vld [vmem:[%s3 + $0x368] sm:$0xff]
    %v161 = vld [vmem:[%s3 + $0x370] sm:$0xff]
    %v162 = vld [vmem:[%s3 + $0x378] sm:$0xff]
    %v163 = vld [vmem:[%s3 + $0x380] sm:$0xff]
    %v164 = vld [vmem:[%s3 + $0x388] sm:$0xff]
    %v165 = vld [vmem:[%s3 + $0x390] sm:$0xff]
    %v166 = vld [vmem:[%s3 + $0x398] sm:$0xff]
    %v167 = vld [vmem:[%s3 + $0x3a0] sm:$0xff]
    %v168 = vld [vmem:[%s3 + $0x3a8] sm:$0xff]
    %v169 = vld [vmem:[%s3 + $0x3b0] sm:$0xff]
    %v170 = vld [vmem:[%s3 + $0x3b8] sm:$0xff]
    %v171 = vld [vmem:[%s3 + $0x3c0] sm:$0xff]
    %v172 = vld [vmem:[%s3 + $0x3c8] sm:$0xff]
    %v173 = vld [vmem:[%s3 + $0x3d0] sm:$0xff]
    %v174 = vld [vmem:[%s3 + $0x3d8] sm:$0xff]
    %v175 = vld [vmem:[%s3 + $0x3e0] sm:$0xff]
    %v176 = vld [vmem:[%s4] sm:$0x1]
    %v178 = vlaneseq
    %v179 = vshrl.u32 %v178, 7
    %v180 = vsub.s32 0, %v179
    %v181 = vrot.slane %v176, %v180
    %vm183 = vcmask 850944
    %v185 = vsel %vm183, %v34, 0
    %v188 = vsel %vm183, %v42, 0
    %v191 = vsel %vm183, %v50, 0
    %193 = vmatprep.subr.mxu0 0.0
    %194 = vmatpush1.msra.mxu0 %v51
    %195 = vmatprep.subr.mxu0 0.0
    %196 = vmatpush1.msra.mxu0 %v52
    %197 = vmatprep.subr.mxu0 0.0
    %198 = vmatpush1.msra.mxu0 %v53
    %199 = vmatprep.subr.mxu0 0.0
    %200 = vmatpush1.msra.mxu0 %v54
    %201 = vmatprep.subr.mxu0 0.0
    %202 = vmatpush1.msra.mxu0 %v55
    %203 = vmatprep.subr.mxu0 0.0
    %204 = vmatpush1.msra.mxu0 %v56
    %205 = vmatprep.subr.mxu0 0.0
    %206 = vmatpush1.msra.mxu0 %v57
    %207 = vmatprep.subr.mxu0 0.0
    %208 = vmatpush1.msra.mxu0 %v58
    %209 = vmatprep.subr.mxu0 0.0
    %210 = vmatpush1.msra.mxu0 %v59
    %211 = vmatprep.subr.mxu0 0.0
    %212 = vmatpush1.msra.mxu0 %v60
    %213 = vmatprep.subr.mxu0 0.0
    %214 = vmatpush1.msra.mxu0 %v61
    %215 = vmatprep.subr.mxu0 0.0
    %216 = vmatpush1.msra.mxu0 %v62
    %217 = vmatprep.subr.mxu0 0.0
    %218 = vmatpush1.msra.mxu0 %v63
    %219 = vmatprep.subr.mxu0 0.0
    %220 = vmatpush1.msra.mxu0 %v64
    %221 = vmatprep.subr.mxu0 0.0
    %222 = vmatpush1.msra.mxu0 %v65
    %223 = vmatprep.subr.mxu0 0.0
    %224 = vmatpush1.msra.mxu0 %v66
    %225 = vmatprep.subr.mxu0 0.0
    %226 = vmatpush1.msra.mxu0 %v67
    %227 = vmatprep.subr.mxu0 0.0
    %228 = vmatpush1.msra.mxu0 %v68
    %229 = vmatprep.subr.mxu0 0.0
    %230 = vmatpush1.msra.mxu0 %v69
    %231 = vmatprep.subr.mxu0 0.0
    %232 = vmatpush1.msra.mxu0 %v70
    %233 = vmatprep.subr.mxu0 0.0
    %234 = vmatpush1.msra.mxu0 %v71
    %235 = vmatprep.subr.mxu0 0.0
    %236 = vmatpush1.msra.mxu0 %v72
    %237 = vmatprep.subr.mxu0 0.0
    %238 = vmatpush1.msra.mxu0 %v73
    %239 = vmatprep.subr.mxu0 0.0
    %240 = vmatpush1.msra.mxu0 %v74
    %241 = vmatprep.subr.mxu0 0.0
    %242 = vmatpush1.msra.mxu0 %v75
    %243 = vmatprep.subr.mxu0 0.0
    %244 = vmatpush1.msra.mxu0 %v76
    %245 = vmatprep.subr.mxu0 0.0
    %246 = vmatpush1.msra.mxu0 %v77
    %247 = vmatprep.subr.mxu0 0.0
    %248 = vmatpush1.msra.mxu0 %v78
    %249 = vmatprep.subr.mxu0 0.0
    %250 = vmatpush1.msra.mxu0 %v79
    %251 = vmatprep.subr.mxu0 0.0
    %252 = vmatpush1.msra.mxu0 %v80
    %253 = vmatprep.subr.mxu0 0.0
    %254 = vmatpush1.msra.mxu0 %v81
    %255 = vmatprep.subr.mxu0 0.0
    %256 = vmatpush1.msra.mxu0 %v82
    %257 = vmatprep.mubr.f32.mxu0 %v28
    %258 = vmatmul.mubr.f32.gmra.mrb[0].mxu0 %v27
    %v259 = vpop.f32.mrb[0].mxu0
    %v260 = vadd.f32 %v181, %v259
    %v261 = vpop.f32.mrb[0].mxu0
    %262 = vmatprep.mubr.f32.mxu0 %v36
    %263 = vmatmul.mubr.f32.gmra.mrb[0].mxu0 %v35
    %v264 = vpop.f32.mrb[0].mxu0
    %v265 = vadd.f32 %v181, %v264
    %v266 = vpop.f32.mrb[0].mxu0
    %267 = vmatprep.mubr.f32.mxu0 %v44
    %268 = vmatmul.mubr.f32.gmra.mrb[0].mxu0 %v43
    %v269 = vpop.f32.mrb[0].mxu0
    %v270 = vadd.f32 %v181, %v269
    %v271 = vpop.f32.mrb[0].mxu0
    %272 = vdwg.mxu0
    %273 = vmatprep.subr.mxu0 0.0
    %274 = vmatpush1.msra.mxu0 %v83
    %275 = vmatprep.subr.mxu0 0.0
    %276 = vmatpush1.msra.mxu0 %v84
    %277 = vmatprep.subr.mxu0 0.0
    %278 = vmatpush1.msra.mxu0 %v85
    %279 = vmatprep.subr.mxu0 0.0
    %280 = vmatpush1.msra.mxu0 %v86
    %281 = vmatprep.subr.mxu0 0.0
    %282 = vmatpush1.msra.mxu0 %v87
    %283 = vmatprep.subr.mxu0 0.0
    %284 = vmatpush1.msra.mxu0 %v88
    %285 = vmatprep.subr.mxu0 0.0
    %286 = vmatpush1.msra.mxu0 %v89
    %287 = vmatprep.subr.mxu0 0.0
    %288 = vmatpush1.msra.mxu0 %v90
    %289 = vmatprep.subr.mxu0 0.0
    %290 = vmatpush1.msra.mxu0 %v91
    %291 = vmatprep.subr.mxu0 0.0
    %292 = vmatpush1.msra.mxu0 %v92
    %293 = vmatprep.subr.mxu0 0.0
    %294 = vmatpush1.msra.mxu0 %v93
    %295 = vmatprep.subr.mxu0 0.0
    %296 = vmatpush1.msra.mxu0 %v94
    %297 = vmatprep.subr.mxu0 0.0
    %298 = vmatpush1.msra.mxu0 %v95
    %299 = vmatprep.subr.mxu0 0.0
    %300 = vmatpush1.msra.mxu0 %v96
    %301 = vmatprep.subr.mxu0 0.0
    %302 = vmatpush1.msra.mxu0 %v97
    %303 = vmatprep.subr.mxu0 0.0
    %304 = vmatpush1.msra.mxu0 %v98
    %305 = vmatprep.subr.mxu0 0.0
    %306 = vmatpush1.msra.mxu0 %v99
    %307 = vmatprep.subr.mxu0 0.0
    %308 = vmatpush1.msra.mxu0 %v100
    %309 = vmatprep.subr.mxu0 0.0
    %310 = vmatpush1.msra.mxu0 %v101
    %311 = vmatprep.subr.mxu0 0.0
    %312 = vmatpush1.msra.mxu0 %v102
    %313 = vmatprep.subr.mxu0 0.0
    %314 = vmatpush1.msra.mxu0 %v103
    %315 = vmatprep.subr.mxu0 0.0
    %316 = vmatpush1.msra.mxu0 %v104
    %317 = vmatprep.subr.mxu0 0.0
    %318 = vmatpush1.msra.mxu0 %v105
    %319 = vmatprep.subr.mxu0 0.0
    %320 = vmatpush1.msra.mxu0 %v106
    %321 = vmatprep.subr.mxu0 0.0
    %322 = vmatpush1.msra.mxu0 %v107
    %323 = vmatprep.subr.mxu0 0.0
    %324 = vmatpush1.msra.mxu0 %v108
    %325 = vmatprep.subr.mxu0 0.0
    %326 = vmatpush1.msra.mxu0 %v109
    %327 = vmatprep.subr.mxu0 0.0
    %328 = vmatpush1.msra.mxu0 %v110
    %329 = vmatprep.subr.mxu0 0.0
    %330 = vmatpush1.msra.mxu0 %v111
    %331 = vmatprep.subr.mxu0 0.0
    %332 = vmatpush1.msra.mxu0 %v112
    %333 = vmatprep.subr.mxu0 0.0
    %334 = vmatpush1.msra.mxu0 %v113
    %335 = vmatprep.subr.mxu0 0.0
    %336 = vmatpush1.msra.mxu0 %v114
    %337 = vmatprep.mubr.f32.mxu0 %v30
    %338 = vmatmul.mubr.f32.gmra.mrb[0].mxu0 %v29
    %v339 = vpop.f32.mrb[0].mxu0
    %v340 = vadd.f32 %v260, %v339
    %v341 = vpop.f32.mrb[0].mxu0
    %342 = vmatprep.mubr.f32.mxu0 %v38
    %343 = vmatmul.mubr.f32.gmra.mrb[0].mxu0 %v37
    %v344 = vpop.f32.mrb[0].mxu0
    %v345 = vadd.f32 %v265, %v344
    %v346 = vpop.f32.mrb[0].mxu0
    %347 = vmatprep.mubr.f32.mxu0 %v46
    %348 = vmatmul.mubr.f32.gmra.mrb[0].mxu0 %v45
    %v349 = vpop.f32.mrb[0].mxu0
    %v350 = vadd.f32 %v270, %v349
    %v351 = vpop.f32.mrb[0].mxu0
    %352 = vdwg.mxu0
    %353 = vmatprep.subr.mxu0 0.0
    %354 = vmatpush1.msra.mxu0 %v115
    %355 = vmatprep.subr.mxu0 0.0
    %356 = vmatpush1.msra.mxu0 %v116
    %357 = vmatprep.subr.mxu0 0.0
    %358 = vmatpush1.msra.mxu0 %v117
    %359 = vmatprep.subr.mxu0 0.0
    %360 = vmatpush1.msra.mxu0 %v118
    %361 = vmatprep.subr.mxu0 0.0
    %362 = vmatpush1.msra.mxu0 %v119
    %363 = vmatprep.subr.mxu0 0.0
    %364 = vmatpush1.msra.mxu0 %v120
    %365 = vmatprep.subr.mxu0 0.0
    %366 = vmatpush1.msra.mxu0 %v121
    %367 = vmatprep.subr.mxu0 0.0
    %368 = vmatpush1.msra.mxu0 %v122
    %369 = vmatprep.subr.mxu0 0.0
    %370 = vmatpush1.msra.mxu0 %v123
    %371 = vmatprep.subr.mxu0 0.0
    %372 = vmatpush1.msra.mxu0 %v124
    %373 = vmatprep.subr.mxu0 0.0
    %374 = vmatpush1.msra.mxu0 %v125
    %375 = vmatprep.subr.mxu0 0.0
    %376 = vmatpush1.msra.mxu0 %v126
    %377 = vmatprep.subr.mxu0 0.0
    %378 = vmatpush1.msra.mxu0 %v127
    %379 = vmatprep.subr.mxu0 0.0
    %380 = vmatpush1.msra.mxu0 %v128
    %381 = vmatprep.subr.mxu0 0.0
    %382 = vmatpush1.msra.mxu0 %v129
    %383 = vmatprep.subr.mxu0 0.0
    %384 = vmatpush1.msra.mxu0 %v130
    %385 = vmatprep.subr.mxu0 0.0
    %386 = vmatpush1.msra.mxu0 %v131
    %387 = vmatprep.subr.mxu0 0.0
    %388 = vmatpush1.msra.mxu0 %v132
    %389 = vmatprep.subr.mxu0 0.0
    %390 = vmatpush1.msra.mxu0 %v133
    %391 = vmatprep.subr.mxu0 0.0
    %392 = vmatpush1.msra.mxu0 %v134
    %393 = vmatprep.subr.mxu0 0.0
    %394 = vmatpush1.msra.mxu0 %v135
    %395 = vmatprep.subr.mxu0 0.0
    %396 = vmatpush1.msra.mxu0 %v136
    %397 = vmatprep.subr.mxu0 0.0
    %398 = vmatpush1.msra.mxu0 %v137
    %399 = vmatprep.subr.mxu0 0.0
    %400 = vmatpush1.msra.mxu0 %v138
    %401 = vmatprep.subr.mxu0 0.0
    %402 = vmatpush1.msra.mxu0 %v139
    %403 = vmatprep.subr.mxu0 0.0
    %404 = vmatpush1.msra.mxu0 %v140
    %405 = vmatprep.subr.mxu0 0.0
    %406 = vmatpush1.msra.mxu0 %v141
    %407 = vmatprep.subr.mxu0 0.0
    %408 = vmatpush1.msra.mxu0 %v142
    %409 = vmatprep.subr.mxu0 0.0
    %410 = vmatpush1.msra.mxu0 %v143
    %411 = vmatprep.subr.mxu0 0.0
    %412 = vmatpush1.msra.mxu0 %v144
    %413 = vmatprep.subr.mxu0 0.0
    %414 = vmatpush1.msra.mxu0 %v145
    %415 = vmatprep.subr.mxu0 0.0
    %416 = vmatpush1.msra.mxu0 %v146
    %417 = vmatprep.mubr.f32.mxu0 %v32
    %418 = vmatmul.mubr.f32.gmra.mrb[0].mxu0 %v31
    %v419 = vpop.f32.mrb[0].mxu0
    %v420 = vadd.f32 %v340, %v419
    %v421 = vpop.f32.mrb[0].mxu0
    %422 = vmatprep.mubr.f32.mxu0 %v40
    %423 = vmatmul.mubr.f32.gmra.mrb[0].mxu0 %v39
    %v424 = vpop.f32.mrb[0].mxu0
    %v425 = vadd.f32 %v345, %v424
    %v426 = vpop.f32.mrb[0].mxu0
    %427 = vmatprep.mubr.f32.mxu0 %v48
    %428 = vmatmul.mubr.f32.gmra.mrb[0].mxu0 %v47
    %v429 = vpop.f32.mrb[0].mxu0
    %v430 = vadd.f32 %v350, %v429
    %v431 = vpop.f32.mrb[0].mxu0
    %432 = vdwg.mxu0
    %433 = vmatprep.subr.mxu0 0.0
    %434 = vmatpush1.msra.mxu0 %v147
    %435 = vmatprep.subr.mxu0 0.0
    %436 = vmatpush1.msra.mxu0 %v148
    %437 = vmatprep.subr.mxu0 0.0
    %438 = vmatpush1.msra.mxu0 %v149
    %439 = vmatprep.subr.mxu0 0.0
    %440 = vmatpush1.msra.mxu0 %v150
    %441 = vmatprep.subr.mxu0 0.0
    %442 = vmatpush1.msra.mxu0 %v151
    %443 = vmatprep.subr.mxu0 0.0
    %444 = vmatpush1.msra.mxu0 %v152
    %445 = vmatprep.subr.mxu0 0.0
    %446 = vmatpush1.msra.mxu0 %v153
    %447 = vmatprep.subr.mxu0 0.0
    %448 = vmatpush1.msra.mxu0 %v154
    %449 = vmatprep.subr.mxu0 0.0
    %450 = vmatpush1.msra.mxu0 %v155
    %451 = vmatprep.subr.mxu0 0.0
    %452 = vmatpush1.msra.mxu0 %v156
    %453 = vmatprep.subr.mxu0 0.0
    %454 = vmatpush1.msra.mxu0 %v157
    %455 = vmatprep.subr.mxu0 0.0
    %456 = vmatpush1.msra.mxu0 %v158
    %457 = vmatprep.subr.mxu0 0.0
    %458 = vmatpush1.msra.mxu0 %v159
    %459 = vmatprep.subr.mxu0 0.0
    %460 = vmatpush1.msra.mxu0 %v160
    %461 = vmatprep.subr.mxu0 0.0
    %462 = vmatpush1.msra.mxu0 %v161
    %463 = vmatprep.subr.mxu0 0.0
    %464 = vmatpush1.msra.mxu0 %v162
    %465 = vmatprep.subr.mxu0 0.0
    %466 = vmatpush1.msra.mxu0 %v163
    %467 = vmatprep.subr.mxu0 0.0
    %468 = vmatpush1.msra.mxu0 %v164
    %469 = vmatprep.subr.mxu0 0.0
    %470 = vmatpush1.msra.mxu0 %v165
    %471 = vmatprep.subr.mxu0 0.0
    %472 = vmatpush1.msra.mxu0 %v166
    %473 = vmatprep.subr.mxu0 0.0
    %474 = vmatpush1.msra.mxu0 %v167
    %475 = vmatprep.subr.mxu0 0.0
    %476 = vmatpush1.msra.mxu0 %v168
    %477 = vmatprep.subr.mxu0 0.0
    %478 = vmatpush1.msra.mxu0 %v169
    %479 = vmatprep.subr.mxu0 0.0
    %480 = vmatpush1.msra.mxu0 %v170
    %481 = vmatprep.subr.mxu0 0.0
    %482 = vmatpush1.msra.mxu0 %v171
    %483 = vmatprep.subr.mxu0 0.0
    %484 = vmatpush1.msra.mxu0 %v172
    %485 = vmatprep.subr.mxu0 0.0
    %486 = vmatpush1.msra.mxu0 %v173
    %487 = vmatprep.subr.mxu0 0.0
    %488 = vmatpush1.msra.mxu0 %v174
    %489 = vmatprep.subr.mxu0 0.0
    %490 = vmatpush1.msra.mxu0 %v175
    %491 = vmatprep.subr.mxu0 0.0
    %492 = vmatpush1.msra.mxu0 0.0
    %493 = vmatprep.subr.mxu0 0.0
    %494 = vmatpush1.msra.mxu0 0.0
    %495 = vmatprep.subr.mxu0 0.0
    %496 = vmatpush1.msra.mxu0 0.0
    %497 = vmatprep.mubr.f32.mxu0 %v185
    %498 = vmatmul.mubr.f32.gmra.mrb[0].mxu0 %v33
    %v499 = vpop.f32.mrb[0].mxu0
    %v500 = vadd.f32 %v420, %v499
    %v501 = vpop.f32.mrb[0].mxu0
    %502 = vmatprep.mubr.f32.mxu0 %v188
    %503 = vmatmul.mubr.f32.gmra.mrb[0].mxu0 %v41
    %v504 = vpop.f32.mrb[0].mxu0
    %v505 = vadd.f32 %v425, %v504
    %v506 = vpop.f32.mrb[0].mxu0
    %507 = vmatprep.mubr.f32.mxu0 %v191
    %508 = vmatmul.mubr.f32.gmra.mrb[0].mxu0 %v49
    %v509 = vpop.f32.mrb[0].mxu0
    %v510 = vadd.f32 %v430, %v509
    %v511 = vpop.f32.mrb[0].mxu0
    %512 = vdwg.mxu0
    %v513 = vmax.f32 %v500, 0.0
    %v514 = vmax.f32 %v505, 0.0
    %v515 = vmax.f32 %v510, 0.0
    %v516 = vld [vmem:[%s5] sm:$0xff]
    %v517 = vld [vmem:[%s5 + $0x8] sm:$0xff]
    %v518 = vld [vmem:[%s5 + $0x10] sm:$0xff]
    %v519 = vld [vmem:[%s5 + $0x18] sm:$0xff]
    %v520 = vld [vmem:[%s5 + $0x20] sm:$0xff]
    %v521 = vld [vmem:[%s5 + $0x28] sm:$0xff]
    %v522 = vld [vmem:[%s5 + $0x30] sm:$0xff]
    %v523 = vld [vmem:[%s5 + $0x38] sm:$0xff]
    %v524 = vld [vmem:[%s5 + $0x40] sm:$0xff]
    %v525 = vld [vmem:[%s5 + $0x48] sm:$0xff]
    %v526 = vld [vmem:[%s5 + $0x50] sm:$0xff]
    %v527 = vld [vmem:[%s5 + $0x58] sm:$0xff]
    %v528 = vld [vmem:[%s5 + $0x60] sm:$0xff]
    %v529 = vld [vmem:[%s5 + $0x68] sm:$0xff]
    %v530 = vld [vmem:[%s5 + $0x70] sm:$0xff]
    %v531 = vld [vmem:[%s5 + $0x78] sm:$0xff]
    %v532 = vld [vmem:[%s6] sm:$0x1]
    %v534 = vlaneseq
    %v535 = vshrl.u32 %v534, 7
    %v536 = vsub.s32 0, %v535
    %v537 = vrot.slane %v532, %v536
    %539 = vmatprep.subr.mxu0 0.0
    %540 = vmatpush1.msra.mxu0 %v516
    %541 = vmatprep.subr.mxu0 0.0
    %542 = vmatpush1.msra.mxu0 %v517
    %543 = vmatprep.subr.mxu0 0.0
    %544 = vmatpush1.msra.mxu0 %v518
    %545 = vmatprep.subr.mxu0 0.0
    %546 = vmatpush1.msra.mxu0 %v519
    %547 = vmatprep.subr.mxu0 0.0
    %548 = vmatpush1.msra.mxu0 %v520
    %549 = vmatprep.subr.mxu0 0.0
    %550 = vmatpush1.msra.mxu0 %v521
    %551 = vmatprep.subr.mxu0 0.0
    %552 = vmatpush1.msra.mxu0 %v522
    %553 = vmatprep.subr.mxu0 0.0
    %554 = vmatpush1.msra.mxu0 %v523
    %555 = vmatprep.subr.mxu0 0.0
    %556 = vmatpush1.msra.mxu0 %v524
    %557 = vmatprep.subr.mxu0 0.0
    %558 = vmatpush1.msra.mxu0 %v525
    %559 = vmatprep.subr.mxu0 0.0
    %560 = vmatpush1.msra.mxu0 %v526
    %561 = vmatprep.subr.mxu0 0.0
    %562 = vmatpush1.msra.mxu0 %v527
    %563 = vmatprep.subr.mxu0 0.0
    %564 = vmatpush1.msra.mxu0 %v528
    %565 = vmatprep.subr.mxu0 0.0
    %566 = vmatpush1.msra.mxu0 %v529
    %567 = vmatprep.subr.mxu0 0.0
    %568 = vmatpush1.msra.mxu0 %v530
    %569 = vmatprep.subr.mxu0 0.0
    %570 = vmatpush1.msra.mxu0 %v531
    %571 = vmatprep.subr.mxu0 0.0
    %572 = vmatpush1.msra.mxu0 0.0
    %573 = vmatprep.subr.mxu0 0.0
    %574 = vmatpush1.msra.mxu0 0.0
    %575 = vmatprep.subr.mxu0 0.0
    %576 = vmatpush1.msra.mxu0 0.0
    %577 = vmatprep.subr.mxu0 0.0
    %578 = vmatpush1.msra.mxu0 0.0
    %579 = vmatprep.subr.mxu0 0.0
    %580 = vmatpush1.msra.mxu0 0.0
    %581 = vmatprep.subr.mxu0 0.0
    %582 = vmatpush1.msra.mxu0 0.0
    %583 = vmatprep.subr.mxu0 0.0
    %584 = vmatpush1.msra.mxu0 0.0
    %585 = vmatprep.subr.mxu0 0.0
    %586 = vmatpush1.msra.mxu0 0.0
    %587 = vmatprep.subr.mxu0 0.0
    %588 = vmatpush1.msra.mxu0 0.0
    %589 = vmatprep.subr.mxu0 0.0
    %590 = vmatpush1.msra.mxu0 0.0
    %591 = vmatprep.subr.mxu0 0.0
    %592 = vmatpush1.msra.mxu0 0.0
    %593 = vmatprep.subr.mxu0 0.0
    %594 = vmatpush1.msra.mxu0 0.0
    %595 = vmatprep.subr.mxu0 0.0
    %596 = vmatpush1.msra.mxu0 0.0
    %597 = vmatprep.subr.mxu0 0.0
    %598 = vmatpush1.msra.mxu0 0.0
    %599 = vmatprep.subr.mxu0 0.0
    %600 = vmatpush1.msra.mxu0 0.0
    %601 = vmatprep.subr.mxu0 0.0
    %602 = vmatpush1.msra.mxu0 0.0
    %603 = vmatprep.mubr.f32.mxu0 0.0
    %604 = vmatmul.mubr.f32.gmra.mrb[0].mxu0 %v513
    %v605 = vpop.f32.mrb[0].mxu0
    %v606 = vadd.f32 %v537, %v605
    %v607 = vpop.f32.mrb[0].mxu0
    %608 = vmatprep.mubr.f32.mxu0 0.0
    %609 = vmatmul.mubr.f32.gmra.mrb[0].mxu0 %v514
    %v610 = vpop.f32.mrb[0].mxu0
    %v611 = vadd.f32 %v537, %v610
    %v612 = vpop.f32.mrb[0].mxu0
    %613 = vmatprep.mubr.f32.mxu0 0.0
    %614 = vmatmul.mubr.f32.gmra.mrb[0].mxu0 %v515
    %v615 = vpop.f32.mrb[0].mxu0
    %v616 = vadd.f32 %v537, %v615
    %v617 = vpop.f32.mrb[0].mxu0
    %618 = vdwg.mxu0
    %v619 = vsub.f32 %v611, %v616
    %v620 = vadd.f32 %v619, 1e-06
    %v621 = vand.u32 2147483647, %v620
    %v622 = vsub.f32 %v606, %v616
    %v623 = vadd.f32 %v622, 1e-06
    %v624 = vand.u32 2147483647, %v623
    %v625 = vsub.f32 %v621, %v624
    %vm626 = vcmask 523264
    %v628 = vsel %vm626, 1.0, 0
    %v631 = vsel %vm626, %v625, 0
    %633 = vmatprep.subr.mxu0 0.0
    %634 = vmatpush1.xpose.msra.mxu0 %v631
    %635 = vmatprep.subr.mxu0 0.0
    %636 = vmatpush1.xpose.msra.mxu0 0.0
    %637 = vmatprep.subr.mxu0 0.0
    %638 = vmatpush1.xpose.msra.mxu0 0.0
    %639 = vmatprep.subr.mxu0 0.0
    %640 = vmatpush1.xpose.msra.mxu0 0.0
    %641 = vmatprep.subr.mxu0 0.0
    %642 = vmatpush1.xpose.msra.mxu0 0.0
    %643 = vmatprep.subr.mxu0 0.0
    %644 = vmatpush1.xpose.msra.mxu0 0.0
    %645 = vmatprep.subr.mxu0 0.0
    %646 = vmatpush1.xpose.msra.mxu0 0.0
    %647 = vmatprep.subr.mxu0 0.0
    %648 = vmatpush1.xpose.msra.mxu0 0.0
    %649 = vmatprep.subr.mxu0 0.0
    %650 = vmatpush1.xpose.msra.mxu0 0.0
    %651 = vmatprep.subr.mxu0 0.0
    %652 = vmatpush1.xpose.msra.mxu0 0.0
    %653 = vmatprep.subr.mxu0 0.0
    %654 = vmatpush1.xpose.msra.mxu0 0.0
    %655 = vmatprep.subr.mxu0 0.0
    %656 = vmatpush1.xpose.msra.mxu0 0.0
    %657 = vmatprep.subr.mxu0 0.0
    %658 = vmatpush1.xpose.msra.mxu0 0.0
    %659 = vmatprep.subr.mxu0 0.0
    %660 = vmatpush1.xpose.msra.mxu0 0.0
    %661 = vmatprep.subr.mxu0 0.0
    %662 = vmatpush1.xpose.msra.mxu0 0.0
    %663 = vmatprep.subr.mxu0 0.0
    %664 = vmatpush1.xpose.msra.mxu0 0.0
    %665 = vmatprep.subr.mxu0 0.0
    %666 = vmatpush1.xpose.msra.mxu0 0.0
    %667 = vmatprep.subr.mxu0 0.0
    %668 = vmatpush1.xpose.msra.mxu0 0.0
    %669 = vmatprep.subr.mxu0 0.0
    %670 = vmatpush1.xpose.msra.mxu0 0.0
    %671 = vmatprep.subr.mxu0 0.0
    %672 = vmatpush1.xpose.msra.mxu0 0.0
    %673 = vmatprep.subr.mxu0 0.0
    %674 = vmatpush1.xpose.msra.mxu0 0.0
    %675 = vmatprep.subr.mxu0 0.0
    %676 = vmatpush1.xpose.msra.mxu0 0.0
    %677 = vmatprep.subr.mxu0 0.0
    %678 = vmatpush1.xpose.msra.mxu0 0.0
    %679 = vmatprep.subr.mxu0 0.0
    %680 = vmatpush1.xpose.msra.mxu0 0.0
    %681 = vmatprep.subr.mxu0 0.0
    %682 = vmatpush1.xpose.msra.mxu0 0.0
    %683 = vmatprep.subr.mxu0 0.0
    %684 = vmatpush1.xpose.msra.mxu0 0.0
    %685 = vmatprep.subr.mxu0 0.0
    %686 = vmatpush1.xpose.msra.mxu0 0.0
    %687 = vmatprep.subr.mxu0 0.0
    %688 = vmatpush1.xpose.msra.mxu0 0.0
    %689 = vmatprep.subr.mxu0 0.0
    %690 = vmatpush1.xpose.msra.mxu0 0.0
    %691 = vmatprep.subr.mxu0 0.0
    %692 = vmatpush1.xpose.msra.mxu0 0.0
    %693 = vmatprep.subr.mxu0 0.0
    %694 = vmatpush1.xpose.msra.mxu0 0.0
    %695 = vmatprep.subr.mxu0 0.0
    %696 = vmatpush1.xpose.msra.mxu0 0.0
    %697 = vmatprep.mubr.f32.mxu0 0.0
    %698 = vmatmul.mubr.f32.gmra.mrb[0].mxu0 %v628
    %v699 = vpop.f32.mrb[0].mxu0
    %v700 = vadd.f32 0.0, %v699
    %v701 = vpop.f32.mrb[0].mxu0
    %702 = vdwg.mxu0
    %vm703 = vcmask 57344
    %704 = vst.msk [vmem:[#allocation2] sm:$0x1] %vm703, %v700
    // Predicated region
    $region30: #{simple6_forward.1} parent=1 // pred_check
      _
    $region31: #{simple6_forward.1} parent=1 // pred_check_branch
      %706 = sbr.rel (0) target = $region33
    $region32: #{simple6_forward.1} parent=1 // pred_region
      %s708 = ssub.s32 16, 16
      %709 = vsyncadd [#allocation3], %s708
      %s711 = sshll.u32 [#allocation2], 4
      %s712 = int_to_ptr.vmem [resolvable:$true] %s711
      %714 = dma.vmem_to_hbm [thread:$0]  %s712, 16, %s7, [#allocation3]
    $region33: #{simple6_forward.1} parent=1 // pred_fallthru
      _
    // Predicated region
    $region34: #{simple6_forward.1} parent=1 // pred_check
      _
    $region35: #{simple6_forward.1} parent=1 // pred_check_branch
      %716 = sbr.rel (0) target = $region37
    $region36: #{simple6_forward.1} parent=1 // pred_region
      %717 = dma.done [#allocation3], 16
    $region37: #{simple6_forward.1} parent=1 // pred_fallthru
      _
    %718 = vsyncpa [#allocation3], 1

</llo_original>
